<compile_context>
chip_gen: v6e
topology: v6e:2x2x1
jax: 0.10.0
libtpu: 0.0.40
codegen_flags: <defaults>
</compile_context>

<pallas_src>
import functools

import jax
import jax.numpy as jnp
from jax.experimental import pallas as pl
from jax.experimental.pallas import tpu as pltpu

_HIDDEN = 256
_LANE = 128
_DEFAULT_TILE_CAP = 256  # rows; sweep {128, 256, 512} if re-tuning


def _round_up(x, m):
    return (x + m - 1) // m * m


@functools.lru_cache(maxsize=1)
def _tensorcores_per_device():
    """Best-effort TensorCore count per JAX device (1 on v5e/v6e, 2 on v7x/megacore)."""
    try:
        dev = jax.devices()[0]
    except Exception:
        return 1
    n = getattr(dev, "num_cores", None)
    if isinstance(n, int) and n > 0:
        return n
    kind = str(getattr(dev, "device_kind", "")).lower()
    if any(tag in kind for tag in ("v4", "v5p", "v7")):
        return 2
    return 1


def _batch_tiling(B, n_cores, cap=_DEFAULT_TILE_CAP):
    """Pick (batch_tile, padded_batch).

    Single-TC chips: one grid step whenever the (8-padded) batch fits under `cap`
    (per-step overhead ~0.35 us dominates this tiny kernel). Dual-TC chips: an even
    number of equal steps so both cores get identical work under ("parallel",).
    """
    b_pad = _round_up(B, 8)
    if n_cores <= 1 or b_pad <= 8:
        if b_pad <= cap:
            return b_pad, b_pad
        tb = cap
        return tb, _round_up(b_pad, tb)
    tb = min(cap, _round_up(pl.cdiv(b_pad, 2), 8))
    n_steps = _round_up(pl.cdiv(b_pad, tb), 2)
    return tb, n_steps * tb


def _actor_kernel(x_ref, w1_ref, b1_ref, w2_ref, b2_ref, w3_ref, b3_ref,
                  o_ref, *, max_action):
    # Layer 1 in f32 (K = state_dim is tiny) for closer parity with the f32 reference.
    x = x_ref[...]
    a = jnp.dot(x, w1_ref[...], preferred_element_type=jnp.float32)
    a = jnp.maximum(a + b1_ref[...], 0.0)
    # Layers 2/3: bf16 operands on the MXU fast path, f32 accumulation.
    a = jnp.dot(a.astype(jnp.bfloat16), w2_ref[...],
                preferred_element_type=jnp.float32)
    a = jnp.maximum(a + b2_ref[...], 0.0)
    a = jnp.dot(a.astype(jnp.bfloat16), w3_ref[...],
                preferred_element_type=jnp.float32)
    # Epilogue stays f32 on VPU/EUP (v5e has no bf16 VALU/EUP).
    o_ref[...] = (max_action * jnp.tanh(a + b3_ref[...])).astype(o_ref.dtype)


def prepare_actor_params(params):
    """One-time parameter preprocessing (hoisted out of the per-call path):
    bf16-cast W2/W3 and zero-pad W3/b3 to a lane-dense 128-wide output."""
    w1, b1, w2, b2, w3, b3 = params
    A = w3.shape[1]
    A_pad = _round_up(max(A, _LANE), _LANE)
    if A_pad != A:
        w3 = jnp.pad(w3, ((0, 0), (0, A_pad - A)))
        b3 = jnp.pad(b3, ((0, 0), (0, A_pad - A)))
    prepped = (w1.astype(jnp.float32), b1.astype(jnp.float32),
               w2.astype(jnp.bfloat16), b2.astype(jnp.float32),
               w3.astype(jnp.bfloat16), b3.astype(jnp.float32))
    return prepped


def actor_forward(state, prepped_params, action_dim, max_action, *,
                  block_b=None, out_dtype=jnp.float32):
    """state: [B, state_dim] f32; prepped_params from prepare_actor_params.
    Returns [B, action_dim] in `out_dtype` (bf16 is fine on v6e/v7x if the
    consumer accepts it; f32 default for parity)."""
    w1, b1, w2, b2, w3, b3 = prepped_params
    B, S = state.shape
    H = w1.shape[1]
    A_pad = w3.shape[1]

    if block_b is None:
        tb, B_pad = _batch_tiling(B, _tensorcores_per_device())
    else:
        tb = block_b
        B_pad = _round_up(B, tb)
    assert tb % 8 == 0 and B_pad % tb == 0

    if B_pad != B:
        state = jnp.pad(state, ((0, B_pad - B), (0, 0)))

    kernel = functools.partial(_actor_kernel, max_action=float(max_action))

    out = pl.pallas_call(
        kernel,
        out_shape=jax.ShapeDtypeStruct((B_pad, A_pad), out_dtype),
        grid_spec=pl.GridSpec(
            grid=(B_pad // tb,),
            in_specs=[
                pl.BlockSpec((tb, S), lambda i: (i, 0)),     # state tile
                pl.BlockSpec((S, H), lambda i: (0, 0)),      # W1 (resident, f32)
                pl.BlockSpec((1, H), lambda i: (0, 0)),      # b1 (f32)
                pl.BlockSpec((H, H), lambda i: (0, 0)),      # W2 (resident, bf16)
                pl.BlockSpec((1, H), lambda i: (0, 0)),      # b2 (f32)
                pl.BlockSpec((H, A_pad), lambda i: (0, 0)),  # W3 (resident, bf16, padded)
                pl.BlockSpec((1, A_pad), lambda i: (0, 0)),  # b3 (f32, padded)
            ],
            out_specs=pl.BlockSpec((tb, A_pad), lambda i: (i, 0)),
        ),
        compiler_params=pltpu.CompilerParams(
            dimension_semantics=("parallel",)),
    )(state, w1, b1, w2, b2, w3, b3)

    # Only materialize the un-padding slice when padding actually happened.
    if B_pad == B and A_pad == action_dim:
        return out
    return out[:B, :action_dim]


def init_actor_params(key, state_dim, action_dim, hidden=_HIDDEN):
    """Deterministic init mimicking nn.Linear default (U(-1/sqrt(fan_in), +...))."""
    def linear(k, fan_in, fan_out):
        kw, kb = jax.random.split(k)
        bound = 1.0 / jnp.sqrt(jnp.float32(fan_in))
        w = jax.random.uniform(kw, (fan_in, fan_out), jnp.float32, -bound, bound)
        b = jax.random.uniform(kb, (1, fan_out), jnp.float32, -bound, bound)
        return w, b

    k1, k2, k3 = jax.random.split(key, 3)
    w1, b1 = linear(k1, state_dim, hidden)
    w2, b2 = linear(k2, hidden, hidden)
    w3, b3 = linear(k3, hidden, action_dim)
    return (w1, b1, w2, b2, w3, b3)


def actor_ref(state, params, max_action):
    """Pure-JAX f32 reference for correctness check."""
    w1, b1, w2, b2, w3, b3 = params
    a = jnp.maximum(state @ w1 + b1, 0.0)
    a = jnp.maximum(a @ w2 + b2, 0.0)
    return max_action * jnp.tanh(a @ w3 + b3)


if __name__ == "__main__":
    key = jax.random.PRNGKey(0)
    k_params, k_state1, k_state2 = jax.random.split(key, 3)

    state_dim = 16
    action_dim = 4
    max_action = 2.0

    params = init_actor_params(k_params, state_dim, action_dim)
    # One-time preprocessing: bf16 cast + lane-dense padding, NOT in the per-call path.
    prepped = prepare_actor_params(params)

    @jax.jit
    def fwd(state):
        return actor_forward(state, prepped, action_dim, max_action)

    # Small single-tile case (typical per-step inference).
    state_small = jax.random.normal(k_state1, (8, state_dim), jnp.float32)
    out_small = jax.block_until_ready(fwd(state_small))
    ref_small = actor_ref(state_small, params, max_action)
    assert out_small.shape == (8, action_dim)
    # bf16 layers 2/3 -> loosened tolerance vs f32 reference.
    assert jnp.allclose(out_small, ref_small, atol=3e-2, rtol=3e-2), "mismatch (small)"

    # Larger batch: exercises the core-count-aware batch tiling path.
    state_big = jax.random.normal(k_state2, (64, state_dim), jnp.float32)
    out_big = jax.block_until_ready(fwd(state_big))
    ref_big = actor_ref(state_big, params, max_action)
    assert out_big.shape == (64, action_dim)
    assert jnp.allclose(out_big, ref_big, atol=3e-2, rtol=3e-2), "mismatch (big)"

    print("KERNEL_OK")
</pallas_src>

<mosaic_0001>
module attributes {stable_mosaic.version = 11 : i64} {
  func.func @_actor_kernel(%arg0: i32, %arg1: memref<8x16xf32, #tpu.memory_space<vmem>>, %arg2: memref<16x256xf32, #tpu.memory_space<vmem>>, %arg3: memref<1x256xf32, #tpu.memory_space<vmem>>, %arg4: memref<256x256xbf16, #tpu.memory_space<vmem>>, %arg5: memref<1x256xf32, #tpu.memory_space<vmem>>, %arg6: memref<256x128xbf16, #tpu.memory_space<vmem>>, %arg7: memref<1x128xf32, #tpu.memory_space<vmem>>, %arg8: memref<8x128xf32, #tpu.memory_space<vmem>>) attributes {dimension_semantics = [#tpu.dimension_semantics<parallel>], iteration_bounds = array<i64: 1>, scalar_prefetch = 0 : i64, scratch_operands = 0 : i64, tpu.core_type = #tpu.core_type<tc>, window_params = [{transform_indices = @transform_0, window_bounds = array<i64: 8, 16>}, {pipeline_mode = #tpu.pipeline_mode<synchronous>, transform_indices = @transform_1, window_bounds = array<i64: 16, 256>}, {pipeline_mode = #tpu.pipeline_mode<synchronous>, transform_indices = @transform_2, window_bounds = array<i64: 1, 256>}, {pipeline_mode = #tpu.pipeline_mode<synchronous>, transform_indices = @transform_3, window_bounds = array<i64: 256, 256>}, {pipeline_mode = #tpu.pipeline_mode<synchronous>, transform_indices = @transform_4, window_bounds = array<i64: 1, 256>}, {pipeline_mode = #tpu.pipeline_mode<synchronous>, transform_indices = @transform_5, window_bounds = array<i64: 256, 128>}, {pipeline_mode = #tpu.pipeline_mode<synchronous>, transform_indices = @transform_6, window_bounds = array<i64: 1, 128>}, {transform_indices = @transform_7, window_bounds = array<i64: 8, 128>}]} {
    %c0 = arith.constant 0 : index
    %c0_0 = arith.constant 0 : index
    %0 = vector.load %arg1[%c0, %c0_0] : memref<8x16xf32, #tpu.memory_space<vmem>>, vector<8x16xf32>
    %c0_1 = arith.constant 0 : index
    %c0_2 = arith.constant 0 : index
    %1 = vector.load %arg2[%c0_1, %c0_2] : memref<16x256xf32, #tpu.memory_space<vmem>>, vector<16x256xf32>
    %cst = arith.constant dense<0.000000e+00> : vector<8x256xf32>
    %2 = tpu.matmul %0, %1, %cst {dimension_numbers = #tpu.dot_dimension_numbers<[1], [0], [0], [1], [0, 0, 1, 1], [], []>} : vector<8x16xf32>, vector<16x256xf32>, vector<8x256xf32> -> vector<8x256xf32>
    %c0_3 = arith.constant 0 : index
    %c0_4 = arith.constant 0 : index
    %3 = vector.load %arg3[%c0_3, %c0_4] : memref<1x256xf32, #tpu.memory_space<vmem>>, vector<1x256xf32>
    %4 = vector.broadcast %3 : vector<1x256xf32> to vector<8x256xf32>
    %5 = arith.addf %2, %4 : vector<8x256xf32>
    %cst_5 = arith.constant 0.000000e+00 : f32
    %6 = vector.broadcast %cst_5 : f32 to vector<8x256xf32>
    %7 = arith.maximumf %5, %6 : vector<8x256xf32>
    %8 = arith.truncf %7 : vector<8x256xf32> to vector<8x256xbf16>
    %c0_6 = arith.constant 0 : index
    %c0_7 = arith.constant 0 : index
    %9 = vector.load %arg4[%c0_6, %c0_7] : memref<256x256xbf16, #tpu.memory_space<vmem>>, vector<256x256xbf16>
    %cst_8 = arith.constant dense<0.000000e+00> : vector<8x256xf32>
    %10 = tpu.matmul %8, %9, %cst_8 {dimension_numbers = #tpu.dot_dimension_numbers<[1], [0], [0], [1], [0, 0, 1, 1], [], []>} : vector<8x256xbf16>, vector<256x256xbf16>, vector<8x256xf32> -> vector<8x256xf32>
    %c0_9 = arith.constant 0 : index
    %c0_10 = arith.constant 0 : index
    %11 = vector.load %arg5[%c0_9, %c0_10] : memref<1x256xf32, #tpu.memory_space<vmem>>, vector<1x256xf32>
    %12 = vector.broadcast %11 : vector<1x256xf32> to vector<8x256xf32>
    %13 = arith.addf %10, %12 : vector<8x256xf32>
    %cst_11 = arith.constant 0.000000e+00 : f32
    %14 = vector.broadcast %cst_11 : f32 to vector<8x256xf32>
    %15 = arith.maximumf %13, %14 : vector<8x256xf32>
    %16 = arith.truncf %15 : vector<8x256xf32> to vector<8x256xbf16>
    %c0_12 = arith.constant 0 : index
    %c0_13 = arith.constant 0 : index
    %17 = vector.load %arg6[%c0_12, %c0_13] : memref<256x128xbf16, #tpu.memory_space<vmem>>, vector<256x128xbf16>
    %cst_14 = arith.constant dense<0.000000e+00> : vector<8x128xf32>
    %18 = tpu.matmul %16, %17, %cst_14 {dimension_numbers = #tpu.dot_dimension_numbers<[1], [0], [0], [1], [0, 0, 1, 1], [], []>} : vector<8x256xbf16>, vector<256x128xbf16>, vector<8x128xf32> -> vector<8x128xf32>
    %c0_15 = arith.constant 0 : index
    %c0_16 = arith.constant 0 : index
    %19 = vector.load %arg7[%c0_15, %c0_16] : memref<1x128xf32, #tpu.memory_space<vmem>>, vector<1x128xf32>
    %20 = vector.broadcast %19 : vector<1x128xf32> to vector<8x128xf32>
    %21 = arith.addf %18, %20 : vector<8x128xf32>
    %22 = math.tanh %21 : vector<8x128xf32>
    %cst_17 = arith.constant 2.000000e+00 : f32
    %23 = vector.broadcast %cst_17 : f32 to vector<8x128xf32>
    %24 = arith.mulf %23, %22 : vector<8x128xf32>
    %c0_18 = arith.constant 0 : index
    %c0_19 = arith.constant 0 : index
    %25 = vector.load %arg8[%c0_18, %c0_19] : memref<8x128xf32, #tpu.memory_space<vmem>>, vector<8x128xf32>
    tpu.vector_store %arg8[%c0_18, %c0_19], %24 {strides = array<i32>} : memref<8x128xf32, #tpu.memory_space<vmem>>, vector<8x128xf32>,
    return
  }
  func.func @transform_0(%arg0: i32) -> (i32, i32) {
    %c0_i32 = arith.constant 0 : i32
    %c0_i32_0 = arith.constant 0 : i32
    return %arg0, %c0_i32 : i32, i32
  }
  func.func @transform_1(%arg0: i32) -> (i32, i32) {
    %c0_i32 = arith.constant 0 : i32
    %c0_i32_0 = arith.constant 0 : i32
    %c0_i32_1 = arith.constant 0 : i32
    return %c0_i32, %c0_i32_0 : i32, i32
  }
  func.func @transform_2(%arg0: i32) -> (i32, i32) {
    %c0_i32 = arith.constant 0 : i32
    %c0_i32_0 = arith.constant 0 : i32
    %c0_i32_1 = arith.constant 0 : i32
    return %c0_i32, %c0_i32_0 : i32, i32
  }
  func.func @transform_3(%arg0: i32) -> (i32, i32) {
    %c0_i32 = arith.constant 0 : i32
    %c0_i32_0 = arith.constant 0 : i32
    %c0_i32_1 = arith.constant 0 : i32
    return %c0_i32, %c0_i32_0 : i32, i32
  }
  func.func @transform_4(%arg0: i32) -> (i32, i32) {
    %c0_i32 = arith.constant 0 : i32
    %c0_i32_0 = arith.constant 0 : i32
    %c0_i32_1 = arith.constant 0 : i32
    return %c0_i32, %c0_i32_0 : i32, i32
  }
  func.func @transform_5(%arg0: i32) -> (i32, i32) {
    %c0_i32 = arith.constant 0 : i32
    %c0_i32_0 = arith.constant 0 : i32
    %c0_i32_1 = arith.constant 0 : i32
    return %c0_i32, %c0_i32_0 : i32, i32
  }
  func.func @transform_6(%arg0: i32) -> (i32, i32) {
    %c0_i32 = arith.constant 0 : i32
    %c0_i32_0 = arith.constant 0 : i32
    %c0_i32_1 = arith.constant 0 : i32
    return %c0_i32, %c0_i32_0 : i32, i32
  }
  func.func @transform_7(%arg0: i32) -> (i32, i32) {
    %c0_i32 = arith.constant 0 : i32
    %c0_i32_0 = arith.constant 0 : i32
    return %arg0, %c0_i32 : i32, i32
  }
}

</mosaic_0001>

<llo_original>
// kernel: fwd.1
$region0: #{fwd.1}
  #allocation0 [shape = 'u32[]', space=smem, size = 0x4, offset = 0x4, fixed_abs, tag = 'smem constant byte address 0x4 - core index']
  #allocation1 [shape = 'u32[144,128]{1,0:T(1,128)}', space=vmem, size = 0x12000, scoped, tag = 'internal scratch']
  %s0 = inlined_call_operand.hbm [shape: f32[8,16], index: 0, kind: input, shape index: {}]
  %s1 = inlined_call_operand.hbm [shape: f32[16,256], index: 1, kind: input, shape index: {}]
  %s2 = inlined_call_operand.hbm [shape: f32[1,256], index: 2, kind: input, shape index: {}]
  %s3 = inlined_call_operand.hbm [shape: bf16[256,256], index: 3, kind: input, shape index: {}]
  %s4 = inlined_call_operand.vmem [shape: f32[1,256], index: 4, kind: input, shape index: {}]
  %s5 = inlined_call_operand.hbm [shape: bf16[256,128], index: 5, kind: input, shape index: {}]
  %s6 = inlined_call_operand.vmem [shape: f32[1,128], index: 6, kind: input, shape index: {}]
  %s7 = inlined_call_operand.vmem [shape: f32[8,128], index: 7, kind: output, shape index: {}]
  %s8 = sld [smem:[#allocation0]]
  $region58: #{fwd.1} parent=0
    _
  %s10 = ssub.s32 1, %s8
  %s11 = scalar_select 0, %s10, %s8
  $region1: #{fwd.1} parent=0
    #allocation2 [shape = 'u8[4096]{0}', space=vmem, size = 0x1000, scoped, tag = 'input window, operand 0, single buffered']
    #allocation3 [shape = 's32[1]{0}', space=sflag, size = 0x4, scoped, tag = 'scoped memory for fwd.1']
    #allocation4 [shape = 'u8[16384]{0}', space=vmem, size = 0x4000, scoped, tag = 'input window, operand 1, single buffered']
    #allocation5 [shape = 's32[1]{0}', space=sflag, size = 0x4, scoped, tag = 'scoped memory for fwd.1']
    #allocation6 [shape = 'u8[1024]{0}', space=vmem, size = 0x400, scoped, tag = 'input window, operand 2, single buffered']
    #allocation7 [shape = 'u8[131072]{0}', space=vmem, size = 0x20000, scoped, tag = 'input window, operand 3, single buffered']
    #allocation8 [shape = 's32[1]{0}', space=sflag, size = 0x4, scoped, tag = 'scoped memory for fwd.1']
    #allocation9 [shape = 'u8[65536]{0}', space=vmem, size = 0x10000, scoped, tag = 'input window, operand 5, single buffered']
    %12 = vsyncpa [#allocation3], 0
    %13 = vsyncpa [#allocation5], 0
    %14 = vsyncpa [#allocation8], 0
    // Predicated region
    $region2: #{fwd.1} parent=1 // pred_check
      _
    $region3: #{fwd.1} parent=1 // pred_check_branch
      %16 = sbr.rel (0) target = $region5
    $region4: #{fwd.1} parent=1 // pred_region
      %s18 = ssub.s32 128, 128
      %19 = vsyncadd [#allocation3], %s18
      %s21 = sshll.u32 [#allocation2], 4
      %s22 = int_to_ptr.vmem [resolvable:$true] %s21
      %24 = dma.hbm_to_vmem [thread:$0]  %s0, 128, %s22, [#allocation3]
    $region5: #{fwd.1} parent=1 // pred_fallthru
      _
    // Predicated region
    $region6: #{fwd.1} parent=1 // pred_check
      _
    $region7: #{fwd.1} parent=1 // pred_check_branch
      %26 = sbr.rel (0) target = $region9
    $region8: #{fwd.1} parent=1 // pred_region
      %s28 = ssub.s32 512, 512
      %29 = vsyncadd [#allocation5], %s28
      %s30 = sshll.u32 [#allocation4], 4
      %s31 = int_to_ptr.vmem [resolvable:$true] %s30
      %36 = dma.hbm_to_vmem [thread:$0]  %s1, 512, %s31, [#allocation5], 256, 256, 16
    $region9: #{fwd.1} parent=1 // pred_fallthru
      _
    // Predicated region
    $region10: #{fwd.1} parent=1 // pred_check
      _
    $region11: #{fwd.1} parent=1 // pred_check_branch
      %38 = sbr.rel (0) target = $region13
    $region12: #{fwd.1} parent=1 // pred_region
      %s40 = ssub.s32 32, 32
      %41 = vsyncadd [#allocation5], %s40
      %s43 = sshll.u32 [#allocation6], 4
      %s44 = int_to_ptr.vmem [resolvable:$true] %s43
      %46 = dma.hbm_to_vmem [thread:$0]  %s2, 32, %s44, [#allocation5]
    $region13: #{fwd.1} parent=1 // pred_fallthru
      _
    // Predicated region
    $region14: #{fwd.1} parent=1 // pred_check
      _
    $region15: #{fwd.1} parent=1 // pred_check_branch
      %48 = sbr.rel (0) target = $region17
    $region16: #{fwd.1} parent=1 // pred_region
      %s50 = ssub.s32 4096, 4096
      %51 = vsyncadd [#allocation8], %s50
      %s52 = sshll.u32 [#allocation7], 4
      %s53 = int_to_ptr.vmem [resolvable:$true] %s52
      %58 = dma.hbm_to_vmem [thread:$0]  %s3, 4096, %s53, [#allocation8], 128, 128, 8
    $region17: #{fwd.1} parent=1 // pred_fallthru
      _
    // Predicated region
    $region18: #{fwd.1} parent=1 // pred_check
      _
    $region19: #{fwd.1} parent=1 // pred_check_branch
      %60 = sbr.rel (0) target = $region21
    $region20: #{fwd.1} parent=1 // pred_region
      _
    $region21: #{fwd.1} parent=1 // pred_fallthru
      _
    // Predicated region
    $region22: #{fwd.1} parent=1 // pred_check
      _
    $region23: #{fwd.1} parent=1 // pred_check_branch
      %62 = sbr.rel (0) target = $region25
    $region24: #{fwd.1} parent=1 // pred_region
      %s64 = ssub.s32 2048, 2048
      %65 = vsyncadd [#allocation8], %s64
      %s66 = sshll.u32 [#allocation9], 4
      %s67 = int_to_ptr.vmem [resolvable:$true] %s66
      %72 = dma.hbm_to_vmem [thread:$0]  %s5, 2048, %s67, [#allocation8], 64, 64, 4
    $region25: #{fwd.1} parent=1 // pred_fallthru
      _
    // Predicated region
    $region26: #{fwd.1} parent=1 // pred_check
      _
    $region27: #{fwd.1} parent=1 // pred_check_branch
      %74 = sbr.rel (0) target = $region29
    $region28: #{fwd.1} parent=1 // pred_region
      _
    $region29: #{fwd.1} parent=1 // pred_fallthru
      _
    // Predicated region
    $region30: #{fwd.1} parent=1 // pred_check
      _
    $region31: #{fwd.1} parent=1 // pred_check_branch
      %76 = sbr.rel (0) target = $region33
    $region32: #{fwd.1} parent=1 // pred_region
      %77 = dma.done [#allocation3], 128
    $region33: #{fwd.1} parent=1 // pred_fallthru
      _
    // Predicated region
    $region34: #{fwd.1} parent=1 // pred_check
      _
    $region35: #{fwd.1} parent=1 // pred_check_branch
      %79 = sbr.rel (0) target = $region37
    $region36: #{fwd.1} parent=1 // pred_region
      %80 = dma.done [#allocation5], 512
    $region37: #{fwd.1} parent=1 // pred_fallthru
      _
    // Predicated region
    $region38: #{fwd.1} parent=1 // pred_check
      _
    $region39: #{fwd.1} parent=1 // pred_check_branch
      %82 = sbr.rel (0) target = $region41
    $region40: #{fwd.1} parent=1 // pred_region
      %83 = dma.done [#allocation5], 32
    $region41: #{fwd.1} parent=1 // pred_fallthru
      _
    // Predicated region
    $region42: #{fwd.1} parent=1 // pred_check
      _
    $region43: #{fwd.1} parent=1 // pred_check_branch
      %85 = sbr.rel (0) target = $region45
    $region44: #{fwd.1} parent=1 // pred_region
      %86 = dma.done [#allocation8], 4096
    $region45: #{fwd.1} parent=1 // pred_fallthru
      _
    // Predicated region
    $region46: #{fwd.1} parent=1 // pred_check
      _
    $region47: #{fwd.1} parent=1 // pred_check_branch
      %88 = sbr.rel (0) target = $region49
    $region48: #{fwd.1} parent=1 // pred_region
      %89 = dma.done [#allocation8], 2048
    $region49: #{fwd.1} parent=1 // pred_fallthru
      _
    %v91 = vld [vmem:[#allocation2] sm:$0xff]
    %v92 = vld [vmem:[#allocation4] sm:$0xff]
    %v93 = vld [vmem:[#allocation4 + $0x8] sm:$0xff]
    %v94 = vld [vmem:[#allocation4 + $0x10] sm:$0xff]
    %v95 = vld [vmem:[#allocation4 + $0x18] sm:$0xff]
    %v96 = vld [vmem:[#allocation6] sm:$0x3]
    %v98 = vlaneseq
    %v99 = vshrl.u32 %v98, 7
    %v100 = vsub.s32 0, %v99
    %v101 = vrot.slane %v96, %v100
    %v102 = vlaneseq
    %v103 = vshrl.u32 %v102, 7
    %v104 = vsub.s32 1, %v103
    %v105 = vrot.slane %v96, %v104
    %vm108 = vcmask 130048
    %v110 = vsel %vm108, %v91, 0
    %112 = vmatprep.subr.mxu0 0.0
    %113 = vmatpush1.msra.mxu0 0.0
    %114 = vmatprep.subr.mxu0 0.0
    %115 = vmatpush1.msra.mxu0 0.0
    %116 = vmatprep.subr.mxu0 0.0
    %117 = vmatpush1.msra.mxu0 0.0
    %118 = vmatprep.subr.mxu0 0.0
    %119 = vmatpush1.msra.mxu0 0.0
    %120 = vmatprep.subr.mxu0 0.0
    %121 = vmatpush1.msra.mxu0 0.0
    %122 = vmatprep.subr.mxu0 0.0
    %123 = vmatpush1.msra.mxu0 0.0
    %124 = vmatprep.subr.mxu0 0.0
    %125 = vmatpush1.msra.mxu0 0.0
    %126 = vmatprep.subr.mxu0 0.0
    %127 = vmatpush1.msra.mxu0 0.0
    %128 = vmatprep.subr.mxu0 0.0
    %129 = vmatpush1.msra.mxu0 0.0
    %130 = vmatprep.subr.mxu0 0.0
    %131 = vmatpush1.msra.mxu0 0.0
    %132 = vmatprep.subr.mxu0 0.0
    %133 = vmatpush1.msra.mxu0 0.0
    %134 = vmatprep.subr.mxu0 0.0
    %135 = vmatpush1.msra.mxu0 0.0
    %136 = vmatprep.subr.mxu0 0.0
    %137 = vmatpush1.msra.mxu0 0.0
    %138 = vmatprep.subr.mxu0 0.0
    %139 = vmatpush1.msra.mxu0 0.0
    %140 = vmatprep.subr.mxu0 %v95
    %141 = vmatpush1.msra.mxu0 %v94
    %142 = vmatprep.subr.mxu0 %v93
    %143 = vmatpush1.msra.mxu0 %v92
    %144 = vmatprep.subr.mxu0 0.0
    %145 = vmatpush2.msra.mxu0 0.0
    %146 = vmatprep.subr.mxu0 0.0
    %147 = vmatpush2.msra.mxu0 0.0
    %148 = vmatprep.subr.mxu0 0.0
    %149 = vmatpush2.msra.mxu0 0.0
    %150 = vmatprep.subr.mxu0 0.0
    %151 = vmatpush2.msra.mxu0 0.0
    %152 = vmatprep.subr.mxu0 0.0
    %153 = vmatpush2.msra.mxu0 0.0
    %154 = vmatprep.subr.mxu0 0.0
    %155 = vmatpush2.msra.mxu0 0.0
    %156 = vmatprep.subr.mxu0 0.0
    %157 = vmatpush2.msra.mxu0 0.0
    %158 = vmatprep.subr.mxu0 0.0
    %159 = vmatpush2.msra.mxu0 0.0
    %160 = vmatprep.subr.mxu0 0.0
    %161 = vmatpush2.msra.mxu0 0.0
    %162 = vmatprep.subr.mxu0 0.0
    %163 = vmatpush2.msra.mxu0 0.0
    %164 = vmatprep.subr.mxu0 0.0
    %165 = vmatpush2.msra.mxu0 0.0
    %166 = vmatprep.subr.mxu0 0.0
    %167 = vmatpush2.msra.mxu0 0.0
    %168 = vmatprep.subr.mxu0 0.0
    %169 = vmatpush2.msra.mxu0 0.0
    %170 = vmatprep.subr.mxu0 0.0
    %171 = vmatpush2.msra.mxu0 0.0
    %172 = vmatprep.subr.mxu0 0.0
    %173 = vmatpush2.msra.mxu0 0.0
    %174 = vmatprep.subr.mxu0 0.0
    %175 = vmatpush2.msra.mxu0 0.0
    %176 = vmatprep.mubr.f32.mxu0 0.0
    %177 = vmatmul.mubr.f32.gmra.mxu0 %v110
    %v178 = vpop.f32.mrf.mxu0
    %v179 = vadd.f32 %v101, %v178
    %v180 = vpop.f32.mrf.mxu0
    %v181 = vadd.f32 %v105, %v180
    %182 = vdwg.mxu0
    %v183 = vmax.f32 %v179, 0.0
    %v184 = vmax.f32 %v181, 0.0
    %v185 = vpack.c.bf16 %v183, %v183
    %v186 = vpack.c.bf16 %v184, %v184
    %v187 = vld [vmem:[#allocation7] sm:$0xff]
    %v188 = vld [vmem:[#allocation7 + $0x8] sm:$0xff]
    %v189 = vld [vmem:[#allocation7 + $0x10] sm:$0xff]
    %v190 = vld [vmem:[#allocation7 + $0x18] sm:$0xff]
    %v191 = vld [vmem:[#allocation7 + $0x20] sm:$0xff]
    %v192 = vld [vmem:[#allocation7 + $0x28] sm:$0xff]
    %v193 = vld [vmem:[#allocation7 + $0x30] sm:$0xff]
    %v194 = vld [vmem:[#allocation7 + $0x38] sm:$0xff]
    %v195 = vld [vmem:[#allocation7 + $0x40] sm:$0xff]
    %v196 = vld [vmem:[#allocation7 + $0x48] sm:$0xff]
    %v197 = vld [vmem:[#allocation7 + $0x50] sm:$0xff]
    %v198 = vld [vmem:[#allocation7 + $0x58] sm:$0xff]
    %v199 = vld [vmem:[#allocation7 + $0x60] sm:$0xff]
    %v200 = vld [vmem:[#allocation7 + $0x68] sm:$0xff]
    %v201 = vld [vmem:[#allocation7 + $0x70] sm:$0xff]
    %v202 = vld [vmem:[#allocation7 + $0x78] sm:$0xff]
    %v203 = vld [vmem:[#allocation7 + $0x80] sm:$0xff]
    %v204 = vld [vmem:[#allocation7 + $0x88] sm:$0xff]
    %v205 = vld [vmem:[#allocation7 + $0x90] sm:$0xff]
    %v206 = vld [vmem:[#allocation7 + $0x98] sm:$0xff]
    %v207 = vld [vmem:[#allocation7 + $0xa0] sm:$0xff]
    %v208 = vld [vmem:[#allocation7 + $0xa8] sm:$0xff]
    %v209 = vld [vmem:[#allocation7 + $0xb0] sm:$0xff]
    %v210 = vld [vmem:[#allocation7 + $0xb8] sm:$0xff]
    %v211 = vld [vmem:[#allocation7 + $0xc0] sm:$0xff]
    %v212 = vld [vmem:[#allocation7 + $0xc8] sm:$0xff]
    %v213 = vld [vmem:[#allocation7 + $0xd0] sm:$0xff]
    %v214 = vld [vmem:[#allocation7 + $0xd8] sm:$0xff]
    %v215 = vld [vmem:[#allocation7 + $0xe0] sm:$0xff]
    %v216 = vld [vmem:[#allocation7 + $0xe8] sm:$0xff]
    %v217 = vld [vmem:[#allocation7 + $0xf0] sm:$0xff]
    %v218 = vld [vmem:[#allocation7 + $0xf8] sm:$0xff]
    %v219 = vld [vmem:[%s4] sm:$0x3]
    %v221 = vlaneseq
    %v222 = vshrl.u32 %v221, 7
    %v223 = vsub.s32 0, %v222
    %v224 = vrot.slane %v219, %v223
    %v225 = vlaneseq
    %v226 = vshrl.u32 %v225, 7
    %v227 = vsub.s32 1, %v226
    %v228 = vrot.slane %v219, %v227
    %v263 = vunpack.c.l.b16 %v187
    %v264 = vunpack.c.h.b16 %v187
    %v265 = vunpack.c.l.b16 %v188
    %v266 = vunpack.c.h.b16 %v188
    %v267 = vunpack.c.l.b16 %v189
    %v268 = vunpack.c.h.b16 %v189
    %v269 = vunpack.c.l.b16 %v190
    %v270 = vunpack.c.h.b16 %v190
    %v271 = vunpack.c.l.b16 %v191
    %v272 = vunpack.c.h.b16 %v191
    %v273 = vunpack.c.l.b16 %v192
    %v274 = vunpack.c.h.b16 %v192
    %v275 = vunpack.c.l.b16 %v193
    %v276 = vunpack.c.h.b16 %v193
    %v277 = vunpack.c.l.b16 %v194
    %v278 = vunpack.c.h.b16 %v194
    %v279 = vunpack.c.l.b16 %v195
    %v280 = vunpack.c.h.b16 %v195
    %v281 = vunpack.c.l.b16 %v196
    %v282 = vunpack.c.h.b16 %v196
    %v283 = vunpack.c.l.b16 %v197
    %v284 = vunpack.c.h.b16 %v197
    %v285 = vunpack.c.l.b16 %v198
    %v286 = vunpack.c.h.b16 %v198
    %v287 = vunpack.c.l.b16 %v199
    %v288 = vunpack.c.h.b16 %v199
    %v289 = vunpack.c.l.b16 %v200
    %v290 = vunpack.c.h.b16 %v200
    %v291 = vunpack.c.l.b16 %v201
    %v292 = vunpack.c.h.b16 %v201
    %v293 = vunpack.c.l.b16 %v202
    %v294 = vunpack.c.h.b16 %v202
    %v295 = vunpack.c.l.b16 %v203
    %v296 = vunpack.c.h.b16 %v203
    %v297 = vunpack.c.l.b16 %v204
    %v298 = vunpack.c.h.b16 %v204
    %v299 = vunpack.c.l.b16 %v205
    %v300 = vunpack.c.h.b16 %v205
    %v301 = vunpack.c.l.b16 %v206
    %v302 = vunpack.c.h.b16 %v206
    %v303 = vunpack.c.l.b16 %v207
    %v304 = vunpack.c.h.b16 %v207
    %v305 = vunpack.c.l.b16 %v208
    %v306 = vunpack.c.h.b16 %v208
    %v307 = vunpack.c.l.b16 %v209
    %v308 = vunpack.c.h.b16 %v209
    %v309 = vunpack.c.l.b16 %v210
    %v310 = vunpack.c.h.b16 %v210
    %v311 = vunpack.c.l.b16 %v211
    %v312 = vunpack.c.h.b16 %v211
    %v313 = vunpack.c.l.b16 %v212
    %v314 = vunpack.c.h.b16 %v212
    %v315 = vunpack.c.l.b16 %v213
    %v316 = vunpack.c.h.b16 %v213
    %v317 = vunpack.c.l.b16 %v214
    %v318 = vunpack.c.h.b16 %v214
    %v319 = vunpack.c.l.b16 %v215
    %v320 = vunpack.c.h.b16 %v215
    %v321 = vunpack.c.l.b16 %v216
    %v322 = vunpack.c.h.b16 %v216
    %v323 = vunpack.c.l.b16 %v217
    %v324 = vunpack.c.h.b16 %v217
    %v325 = vunpack.c.l.b16 %v218
    %v326 = vunpack.c.h.b16 %v218
    %v327 = vpack.c.b16 %v265, %v263
    %v328 = vpack.c.b16 %v266, %v264
    %v329 = vpack.c.b16 %v269, %v267
    %v330 = vpack.c.b16 %v270, %v268
    %v331 = vpack.c.b16 %v273, %v271
    %v332 = vpack.c.b16 %v274, %v272
    %v333 = vpack.c.b16 %v277, %v275
    %v334 = vpack.c.b16 %v278, %v276
    %v335 = vpack.c.b16 %v281, %v279
    %v336 = vpack.c.b16 %v282, %v280
    %v337 = vpack.c.b16 %v285, %v283
    %v338 = vpack.c.b16 %v286, %v284
    %v339 = vpack.c.b16 %v289, %v287
    %v340 = vpack.c.b16 %v290, %v288
    %v341 = vpack.c.b16 %v293, %v291
    %v342 = vpack.c.b16 %v294, %v292
    %v343 = vpack.c.b16 %v297, %v295
    %v344 = vpack.c.b16 %v298, %v296
    %v345 = vpack.c.b16 %v301, %v299
    %v346 = vpack.c.b16 %v302, %v300
    %v347 = vpack.c.b16 %v305, %v303
    %v348 = vpack.c.b16 %v306, %v304
    %v349 = vpack.c.b16 %v309, %v307
    %v350 = vpack.c.b16 %v310, %v308
    %v351 = vpack.c.b16 %v313, %v311
    %v352 = vpack.c.b16 %v314, %v312
    %v353 = vpack.c.b16 %v317, %v315
    %v354 = vpack.c.b16 %v318, %v316
    %v355 = vpack.c.b16 %v321, %v319
    %v356 = vpack.c.b16 %v322, %v320
    %v357 = vpack.c.b16 %v325, %v323
    %v358 = vpack.c.b16 %v326, %v324
    %391 = vmatprep.subr.bf16.mxu0 %v342
    %392 = vmatpush1.bf16.msra.mxu0 %v341
    %393 = vmatprep.subr.bf16.mxu0 %v340
    %394 = vmatpush1.bf16.msra.mxu0 %v339
    %395 = vmatprep.subr.bf16.mxu0 %v338
    %396 = vmatpush1.bf16.msra.mxu0 %v337
    %397 = vmatprep.subr.bf16.mxu0 %v336
    %398 = vmatpush1.bf16.msra.mxu0 %v335
    %399 = vmatprep.subr.bf16.mxu0 %v334
    %400 = vmatpush1.bf16.msra.mxu0 %v333
    %401 = vmatprep.subr.bf16.mxu0 %v332
    %402 = vmatpush1.bf16.msra.mxu0 %v331
    %403 = vmatprep.subr.bf16.mxu0 %v330
    %404 = vmatpush1.bf16.msra.mxu0 %v329
    %405 = vmatprep.subr.bf16.mxu0 %v328
    %406 = vmatpush1.bf16.msra.mxu0 %v327
    %407 = vmatprep.subr.bf16.mxu0 %v358
    %408 = vmatpush2.bf16.msra.mxu0 %v357
    %409 = vmatprep.subr.bf16.mxu0 %v356
    %410 = vmatpush2.bf16.msra.mxu0 %v355
    %411 = vmatprep.subr.bf16.mxu0 %v354
    %412 = vmatpush2.bf16.msra.mxu0 %v353
    %413 = vmatprep.subr.bf16.mxu0 %v352
    %414 = vmatpush2.bf16.msra.mxu0 %v351
    %415 = vmatprep.subr.bf16.mxu0 %v350
    %416 = vmatpush2.bf16.msra.mxu0 %v349
    %417 = vmatprep.subr.bf16.mxu0 %v348
    %418 = vmatpush2.bf16.msra.mxu0 %v347
    %419 = vmatprep.subr.bf16.mxu0 %v346
    %420 = vmatpush2.bf16.msra.mxu0 %v345
    %421 = vmatprep.subr.bf16.mxu0 %v344
    %422 = vmatpush2.bf16.msra.mxu0 %v343
    %423 = vmatprep.mubr.bf16.mxu0 %v186
    %424 = vmatmul.mubr.bf16.gmra.mxu0 %v185
    %v425 = vpop.f32.mrf.mxu0
    %v426 = vadd.f32 %v224, %v425
    %v427 = vpop.f32.mrf.mxu0
    %v428 = vadd.f32 %v228, %v427
    %v429 = vpop.f32.mrf.mxu0
    %v430 = vpop.f32.mrf.mxu0
    %431 = vdwg.mxu0
    %v432 = vmax.f32 %v426, 0.0
    %v433 = vmax.f32 %v428, 0.0
    %v434 = vpack.c.bf16 %v432, %v432
    %v435 = vpack.c.bf16 %v433, %v433
    %v436 = vld [vmem:[#allocation9] sm:$0xf]
    %v437 = vld [vmem:[#allocation9 + $0x4] sm:$0xf]
    %v438 = vld [vmem:[#allocation9 + $0x8] sm:$0xf]
    %v439 = vld [vmem:[#allocation9 + $0xc] sm:$0xf]
    %v440 = vld [vmem:[#allocation9 + $0x10] sm:$0xf]
    %v441 = vld [vmem:[#allocation9 + $0x14] sm:$0xf]
    %v442 = vld [vmem:[#allocation9 + $0x18] sm:$0xf]
    %v443 = vld [vmem:[#allocation9 + $0x1c] sm:$0xf]
    %v444 = vld [vmem:[#allocation9 + $0x20] sm:$0xf]
    %v445 = vld [vmem:[#allocation9 + $0x24] sm:$0xf]
    %v446 = vld [vmem:[#allocation9 + $0x28] sm:$0xf]
    %v447 = vld [vmem:[#allocation9 + $0x2c] sm:$0xf]
    %v448 = vld [vmem:[#allocation9 + $0x30] sm:$0xf]
    %v449 = vld [vmem:[#allocation9 + $0x34] sm:$0xf]
    %v450 = vld [vmem:[#allocation9 + $0x38] sm:$0xf]
    %v451 = vld [vmem:[#allocation9 + $0x3c] sm:$0xf]
    %v452 = vld [vmem:[#allocation9 + $0x40] sm:$0xf]
    %v453 = vld [vmem:[#allocation9 + $0x44] sm:$0xf]
    %v454 = vld [vmem:[#allocation9 + $0x48] sm:$0xf]
    %v455 = vld [vmem:[#allocation9 + $0x4c] sm:$0xf]
    %v456 = vld [vmem:[#allocation9 + $0x50] sm:$0xf]
    %v457 = vld [vmem:[#allocation9 + $0x54] sm:$0xf]
    %v458 = vld [vmem:[#allocation9 + $0x58] sm:$0xf]
    %v459 = vld [vmem:[#allocation9 + $0x5c] sm:$0xf]
    %v460 = vld [vmem:[#allocation9 + $0x60] sm:$0xf]
    %v461 = vld [vmem:[#allocation9 + $0x64] sm:$0xf]
    %v462 = vld [vmem:[#allocation9 + $0x68] sm:$0xf]
    %v463 = vld [vmem:[#allocation9 + $0x6c] sm:$0xf]
    %v464 = vld [vmem:[#allocation9 + $0x70] sm:$0xf]
    %v465 = vld [vmem:[#allocation9 + $0x74] sm:$0xf]
    %v466 = vld [vmem:[#allocation9 + $0x78] sm:$0xf]
    %v467 = vld [vmem:[#allocation9 + $0x7c] sm:$0xf]
    %v468 = vld [vmem:[%s6] sm:$0x1]
    %v470 = vlaneseq
    %v471 = vshrl.u32 %v470, 7
    %v472 = vsub.s32 0, %v471
    %v473 = vrot.slane %v468, %v472
    %v507 = vunpack.c.l.b16 %v436
    %v508 = vunpack.c.l.b16 %v437
    %v509 = vunpack.c.l.b16 %v438
    %v510 = vunpack.c.l.b16 %v439
    %v511 = vunpack.c.l.b16 %v440
    %v512 = vunpack.c.l.b16 %v441
    %v513 = vunpack.c.l.b16 %v442
    %v514 = vunpack.c.l.b16 %v443
    %v515 = vunpack.c.l.b16 %v444
    %v516 = vunpack.c.l.b16 %v445
    %v517 = vunpack.c.l.b16 %v446
    %v518 = vunpack.c.l.b16 %v447
    %v519 = vunpack.c.l.b16 %v448
    %v520 = vunpack.c.l.b16 %v449
    %v521 = vunpack.c.l.b16 %v450
    %v522 = vunpack.c.l.b16 %v451
    %v523 = vunpack.c.l.b16 %v452
    %v524 = vunpack.c.l.b16 %v453
    %v525 = vunpack.c.l.b16 %v454
    %v526 = vunpack.c.l.b16 %v455
    %v527 = vunpack.c.l.b16 %v456
    %v528 = vunpack.c.l.b16 %v457
    %v529 = vunpack.c.l.b16 %v458
    %v530 = vunpack.c.l.b16 %v459
    %v531 = vunpack.c.l.b16 %v460
    %v532 = vunpack.c.l.b16 %v461
    %v533 = vunpack.c.l.b16 %v462
    %v534 = vunpack.c.l.b16 %v463
    %v535 = vunpack.c.l.b16 %v464
    %v536 = vunpack.c.l.b16 %v465
    %v537 = vunpack.c.l.b16 %v466
    %v538 = vunpack.c.l.b16 %v467
    %v539 = vpack.c.b16 %v508, %v507
    %v540 = vpack.c.b16 %v510, %v509
    %v541 = vpack.c.b16 %v512, %v511
    %v542 = vpack.c.b16 %v514, %v513
    %v543 = vpack.c.b16 %v516, %v515
    %v544 = vpack.c.b16 %v518, %v517
    %v545 = vpack.c.b16 %v520, %v519
    %v546 = vpack.c.b16 %v522, %v521
    %v547 = vpack.c.b16 %v524, %v523
    %v548 = vpack.c.b16 %v526, %v525
    %v549 = vpack.c.b16 %v528, %v527
    %v550 = vpack.c.b16 %v530, %v529
    %v551 = vpack.c.b16 %v532, %v531
    %v552 = vpack.c.b16 %v534, %v533
    %v553 = vpack.c.b16 %v536, %v535
    %v554 = vpack.c.b16 %v538, %v537
    %571 = vmatprep.subr.bf16.mxu0 0
    %572 = vmatpush1.bf16.msra.mxu0 %v546
    %573 = vmatprep.subr.bf16.mxu0 0
    %574 = vmatpush1.bf16.msra.mxu0 %v545
    %575 = vmatprep.subr.bf16.mxu0 0
    %576 = vmatpush1.bf16.msra.mxu0 %v544
    %577 = vmatprep.subr.bf16.mxu0 0
    %578 = vmatpush1.bf16.msra.mxu0 %v543
    %579 = vmatprep.subr.bf16.mxu0 0
    %580 = vmatpush1.bf16.msra.mxu0 %v542
    %581 = vmatprep.subr.bf16.mxu0 0
    %582 = vmatpush1.bf16.msra.mxu0 %v541
    %583 = vmatprep.subr.bf16.mxu0 0
    %584 = vmatpush1.bf16.msra.mxu0 %v540
    %585 = vmatprep.subr.bf16.mxu0 0
    %586 = vmatpush1.bf16.msra.mxu0 %v539
    %587 = vmatprep.subr.bf16.mxu0 0
    %588 = vmatpush2.bf16.msra.mxu0 %v554
    %589 = vmatprep.subr.bf16.mxu0 0
    %590 = vmatpush2.bf16.msra.mxu0 %v553
    %591 = vmatprep.subr.bf16.mxu0 0
    %592 = vmatpush2.bf16.msra.mxu0 %v552
    %593 = vmatprep.subr.bf16.mxu0 0
    %594 = vmatpush2.bf16.msra.mxu0 %v551
    %595 = vmatprep.subr.bf16.mxu0 0
    %596 = vmatpush2.bf16.msra.mxu0 %v550
    %597 = vmatprep.subr.bf16.mxu0 0
    %598 = vmatpush2.bf16.msra.mxu0 %v549
    %599 = vmatprep.subr.bf16.mxu0 0
    %600 = vmatpush2.bf16.msra.mxu0 %v548
    %601 = vmatprep.subr.bf16.mxu0 0
    %602 = vmatpush2.bf16.msra.mxu0 %v547
    %603 = vmatprep.mubr.bf16.mxu0 %v435
    %604 = vmatmul.mubr.bf16.gmra.mxu0 %v434
    %v605 = vpop.f32.mrf.mxu0
    %v606 = vadd.f32 %v473, %v605
    %v607 = vpop.f32.mrf.mxu0
    %v608 = vpop.f32.mrf.mxu0
    %v609 = vpop.f32.mrf.mxu0
    %610 = vdwg.mxu0
    %v611 = vtanh.pop %v606
    %v612 = vmul.f32 %v611, 2.0
    %613 = vst [vmem:[%s7] sm:$0xff] %v612
    // Predicated region
    $region50: #{fwd.1} parent=1 // pred_check
      _
    $region51: #{fwd.1} parent=1 // pred_check_branch
      %615 = sbr.rel (0) target = $region53
    $region52: #{fwd.1} parent=1 // pred_region
      _
    $region53: #{fwd.1} parent=1 // pred_fallthru
      _
    // Predicated region
    $region54: #{fwd.1} parent=1 // pred_check
      _
    $region55: #{fwd.1} parent=1 // pred_check_branch
      %617 = sbr.rel (0) target = $region57
    $region56: #{fwd.1} parent=1 // pred_region
      _
    $region57: #{fwd.1} parent=1 // pred_fallthru
      _
    %618 = vsyncpa [#allocation3], 1
    %619 = vsyncpa [#allocation5], 1
    %620 = vsyncpa [#allocation8], 1

</llo_original>
